<compile_context>
chip_gen: v5e
topology: v5e:2x2
jax: 0.10.0
libtpu: 0.0.40
codegen_flags: <defaults>
</compile_context>

<pallas_src>
import functools

import jax
import jax.numpy as jnp
from jax.experimental import pallas as pl
from jax.experimental.pallas import tpu as pltpu

SELU_ALPHA = 1.6732632423543772
SELU_SCALE = 1.0507009873554805
LN_EPS = 1e-5


def _round_up(a, m):
    return -(-a // m) * m


def _auto_bf16_elementwise():
    # bf16 VALU/EUP exist on v6e and later; v5e/v5p and older lack them -> keep f32.
    try:
        kind = jax.devices()[0].device_kind.lower()
    except Exception:
        return False
    return ("v6" in kind) or ("v7" in kind) or ("7x" in kind)


def _selu(x):
    # torch.nn.SELU; exp kept in f32 (EUP-accuracy parity across generations), while the
    # VALU ops (compare / select / mul / add) run in x.dtype (bf16 on v6e/v7x, f32 on v5e).
    em1 = (jnp.exp(jnp.minimum(x.astype(jnp.float32), 0.0)) - 1.0).astype(x.dtype)
    return (SELU_SCALE * jnp.where(x > 0, x, SELU_ALPHA * em1)).astype(x.dtype)


def _layernorm(y, w, b, *, axis, out_dtype):
    # torch.nn.LayerNorm (biased variance, eps=1e-5); stats always in f32, affine in
    # out_dtype.  Used by both the kernel (axis=0, feature-major) and the reference
    # (axis=-1) so the two paths apply identical rounding.
    yf = y.astype(jnp.float32)
    mu = jnp.mean(yf, axis=axis, keepdims=True)
    yc = yf - mu
    var = jnp.mean(yc * yc, axis=axis, keepdims=True)
    yn = (yc * jax.lax.rsqrt(var + LN_EPS)).astype(out_dtype)
    return yn * w.astype(out_dtype) + b.astype(out_dtype)


def _embedding_kernel(n_layers, d_embed, mm_dtype, ew_dtype,
                      x_ref, w1t_ref, wlt_ref, wet_ref, wht_ref,
                      hvec_ref, evec_ref, hbias_ref, out_ref):
    f32 = jnp.float32
    x = x_ref[...]                                            # (d_in, tm) f32, lane-dense

    # Linear(d_in, d_hid) + SELU, feature-major: h = W1^T @ x + b1  -> (d_hid, tm)
    h = jnp.dot(w1t_ref[...], x.astype(mm_dtype),
                preferred_element_type=f32) + hvec_ref[:, 0:1]
    h = _selu(h.astype(ew_dtype))

    # n_layers x SkipConnection(Linear -> LayerNorm -> SELU); LayerNorm reduces over the
    # feature (sublane) axis so the reduction uses the XLU, off the VALU slot.
    # TODO(synk): switch to lax.fori_loop with a dynamic wlt_ref[l] index if n_layers > ~8.
    for l in range(n_layers):
        c = 1 + 3 * l
        y = jnp.dot(wlt_ref[l], h.astype(mm_dtype),
                    preferred_element_type=f32) + hvec_ref[:, c:c + 1]
        y = _layernorm(y, hvec_ref[:, c + 1:c + 2], hvec_ref[:, c + 2:c + 3],
                       axis=0, out_dtype=ew_dtype)
        h = h + _selu(y)

    # Linear(d_hid, d_embed) + LayerNorm -> embedding, kept in f32 (exact passthrough).
    e = jnp.dot(wet_ref[...], h.astype(mm_dtype),
                preferred_element_type=f32) + evec_ref[:, 0:1]
    e = _layernorm(e, evec_ref[:, 1:2], evec_ref[:, 2:3], axis=0, out_dtype=f32)

    # Output slab rows: [0:d_embed]=embedding, [+0:+5]=lin_output, [+5:+7]=diff
    # (pre-arctan2), [+7]=alignment pad.  Embedding is stored directly (no head matmul),
    # the tiny 8-row head carries Wo^T (rows 0-4) and Wo^T[:2] (rows 5-6).
    out_ref[0:d_embed, :] = e
    lin8 = jnp.dot(wht_ref[...], e.astype(mm_dtype),
                   preferred_element_type=f32) + hbias_ref[...]
    out_ref[d_embed:, :] = lin8
    out_ref[d_embed + 5:d_embed + 7, :] = lin8[5:7, :] - x[0:2, :]


def snapshot_embedding_net(x, params, *, n_layers, tm=4096, use_bf16=True,
                           bf16_elementwise=None):
    B, S, d_in = x.shape
    N = B * S
    d_hid = params["w1"].shape[1]
    d_embed = params["we"].shape[1]
    d_head = 8                       # 5 lin_output rows + 2 diff rows + 1 alignment pad
    d_total = d_embed + d_head

    f32 = jnp.float32
    mm_dtype = jnp.bfloat16 if use_bf16 else f32
    if bf16_elementwise is None:
        bf16_elementwise = _auto_bf16_elementwise()
    ew_dtype = jnp.bfloat16 if (use_bf16 and bf16_elementwise) else f32

    # --- tile selection: samples live on the 128-lane axis --------------------------------
    # Big tiles amortize per-grid-step overhead; cap near N/2 and keep the step count even
    # so v7x megacore can split the "parallel" axis across both TensorCores.
    lane = 128
    tm_eff = min(tm, _round_up(N, lane))
    if N > lane:
        tm_eff = min(tm_eff, _round_up(-(-N // 2), lane))
    tm_eff = max(lane, _round_up(tm_eff, lane))
    steps = -(-N // tm_eff)
    if steps > 1 and steps % 2:
        steps += 1
    n_pad = steps * tm_eff

    # Feature-major input (d_in, N); padded columns are zero.  They flow through LayerNorm
    # as constants (var=0 -> output = LN bias, finite) and are sliced off before arctan2 or
    # any cross-sample use, so they never pollute real results.
    xf = x.reshape(N, d_in).astype(f32).T
    if n_pad != N:
        xf = jnp.pad(xf, ((0, 0), (0, n_pad - N)))

    # --- transposed matmul weights (cast once to the matmul dtype) ------------------------
    w1t = params["w1"].T.astype(mm_dtype)                     # (d_hid, d_in)
    wlt = params["wl"].transpose(0, 2, 1).astype(mm_dtype)    # (L, d_hid, d_hid)
    wet = params["we"].T.astype(mm_dtype)                     # (d_embed, d_hid)

    wo_t = params["wo"].T.astype(f32)                         # (5, d_embed)
    bo = params["bo"].reshape(-1).astype(f32)                 # (5,)
    wht = jnp.zeros((d_head, d_embed), f32)
    wht = wht.at[0:5].set(wo_t).at[5:7].set(wo_t[:2]).astype(mm_dtype)
    hbias = jnp.zeros((d_head, 1), f32)
    hbias = hbias.at[0:5, 0].set(bo).at[5:7, 0].set(bo[:2])

    # --- per-feature bias / LayerNorm vectors, stacked into two feature-major slabs -------
    cols = [params["b1"].reshape(d_hid)]
    for l in range(n_layers):
        cols += [params["bl"][l], params["lnw"][l], params["lnb"][l]]
    hvec = jnp.stack(cols, axis=1).astype(f32)                # (d_hid, 1 + 3L)
    evec = jnp.stack([params["be"].reshape(d_embed),
                      params["lnew"].reshape(d_embed),
                      params["lneb"].reshape(d_embed)], axis=1).astype(f32)  # (d_embed, 3)

    operands = (xf, w1t, wlt, wet, wht, hvec, evec, hbias)

    def full(arr):
        zeros = (0,) * arr.ndim
        return pl.BlockSpec(arr.shape, lambda i: zeros)       # grid-invariant, stays resident

    flops = 2 * n_pad * (d_hid * d_in + n_layers * d_hid * d_hid
                         + d_embed * d_hid + d_head * d_embed)
    transcendentals = n_pad * (d_hid * (n_layers + 1) + (n_layers + 2))
    bytes_accessed = int(sum(int(a.size) * a.dtype.itemsize for a in operands)
                         + n_pad * d_total * 4)

    out = pl.pallas_call(
        functools.partial(_embedding_kernel, n_layers, d_embed, mm_dtype, ew_dtype),
        out_shape=jax.ShapeDtypeStruct((d_total, n_pad), f32),
        grid=(n_pad // tm_eff,),
        in_specs=[
            pl.BlockSpec((d_in, tm_eff), lambda i: (0, i)),   # sample columns
            full(w1t), full(wlt), full(wet), full(wht),
            full(hvec), full(evec), full(hbias),
        ],
        out_specs=pl.BlockSpec((d_total, tm_eff), lambda i: (0, i)),
        compiler_params=pltpu.CompilerParams(dimension_semantics=("parallel",)),
        cost_estimate=pl.CostEstimate(flops=int(flops),
                                      transcendentals=int(transcendentals),
                                      bytes_accessed=bytes_accessed),
    )(*operands)

    out = out[:, :N]
    emb = out[:d_embed].T.reshape(B, S, d_embed)
    lin4 = out[d_embed:d_embed + 4]                 # (4, N): lin_output columns 0..3
    diff = out[d_embed + 5:d_embed + 7]             # (2, N): lin_output[:2] - x[:2]
    ang = jnp.arctan2(diff[1], diff[0])             # tiny (N,) elementwise wrapper tail
    output = jnp.concatenate([lin4, ang[None, :]], axis=0).T.reshape(B, S, 5)
    return {"embedding": emb, "output": output}


def init_params(key, d_in, d_hid, d_embed, n_layers):
    ks = jax.random.split(key, 8)
    s = 0.1
    return {
        "w1": jax.random.normal(ks[0], (d_in, d_hid), jnp.float32) * s,
        "b1": jax.random.normal(ks[1], (1, d_hid), jnp.float32) * s,
        "wl": jax.random.normal(ks[2], (n_layers, d_hid, d_hid), jnp.float32) * s,
        "bl": jax.random.normal(ks[3], (n_layers, d_hid), jnp.float32) * s,
        "lnw": jnp.ones((n_layers, d_hid), jnp.float32),    # LayerNorm default weight=1
        "lnb": jnp.zeros((n_layers, d_hid), jnp.float32),   # LayerNorm default bias=0
        "we": jax.random.normal(ks[4], (d_hid, d_embed), jnp.float32) * s,
        "be": jax.random.normal(ks[5], (1, d_embed), jnp.float32) * s,
        "lnew": jnp.ones((1, d_embed), jnp.float32),
        "lneb": jnp.zeros((1, d_embed), jnp.float32),
        "wo": jax.random.normal(ks[6], (d_embed, 5), jnp.float32) * s,
        "bo": jax.random.normal(ks[7], (1, 5), jnp.float32) * s,
    }


def _reference(x, p, n_layers, use_bf16, bf16_elementwise):
    # Pure-JAX reference (row-major) mirroring the kernel's dtype casting points exactly.
    f32 = jnp.float32
    mmd = jnp.bfloat16 if use_bf16 else f32
    ewd = jnp.bfloat16 if (use_bf16 and bf16_elementwise) else f32
    B, S, d_in = x.shape
    xf = x.reshape(-1, d_in).astype(f32)
    h = jnp.dot(xf.astype(mmd), p["w1"].astype(mmd), preferred_element_type=f32) + p["b1"]
    h = _selu(h.astype(ewd))
    for l in range(n_layers):
        y = jnp.dot(h.astype(mmd), p["wl"][l].astype(mmd),
                    preferred_element_type=f32) + p["bl"][l][None, :]
        y = _layernorm(y, p["lnw"][l][None, :], p["lnb"][l][None, :],
                       axis=-1, out_dtype=ewd)
        h = h + _selu(y)
    e = jnp.dot(h.astype(mmd), p["we"].astype(mmd), preferred_element_type=f32) + p["be"]
    e = _layernorm(e, p["lnew"], p["lneb"], axis=-1, out_dtype=f32)
    o = jnp.dot(e.astype(mmd), p["wo"].astype(mmd), preferred_element_type=f32) + p["bo"]
    diff = o[:, :2] - xf[:, :2]
    out = jnp.concatenate([o[:, :4], jnp.arctan2(diff[:, 1], diff[:, 0])[:, None]], axis=-1)
    return {"embedding": e.reshape(B, S, -1), "output": out.reshape(B, S, 5)}


if __name__ == "__main__":
    d_in, d_hid, d_embed, n_layers = 4, 32, 16, 2
    B, S = 2, 8

    key = jax.random.PRNGKey(0)
    kx, kp = jax.random.split(key)
    x = jax.random.normal(kx, (B, S, d_in), jnp.float32)
    params = init_params(kp, d_in, d_hid, d_embed, n_layers)

    # f32-matmul / f32-elementwise path: tight check against the pure-JAX reference.
    res32 = snapshot_embedding_net(x, params, n_layers=n_layers,
                                   use_bf16=False, bf16_elementwise=False)
    jax.block_until_ready(res32)
    ref32 = _reference(x, params, n_layers, use_bf16=False, bf16_elementwise=False)
    assert res32["embedding"].shape == (B, S, d_embed)
    assert res32["output"].shape == (B, S, 5)
    assert jnp.allclose(res32["embedding"], ref32["embedding"], atol=2e-3, rtol=2e-3)
    assert jnp.allclose(res32["output"], ref32["output"], atol=2e-3, rtol=2e-3)

    # Default path: bf16 matmul operands everywhere; bf16 elementwise auto on v6e/v7x only.
    ew = _auto_bf16_elementwise()
    res = snapshot_embedding_net(x, params, n_layers=n_layers)
    jax.block_until_ready(res)
    ref = _reference(x, params, n_layers, use_bf16=True, bf16_elementwise=ew)
    assert bool(jnp.all(jnp.isfinite(res["embedding"])))
    assert bool(jnp.all(jnp.isfinite(res["output"])))
    if ew:
        # bf16 elementwise: allow a few bf16 ulps of drift; the arctan2 column gets an
        # absolute slack since small |diff| amplifies operand rounding.
        assert jnp.allclose(res["embedding"], ref["embedding"], atol=3e-2, rtol=3e-2)
        assert jnp.allclose(res["output"][..., :4], ref["output"][..., :4],
                            atol=3e-2, rtol=3e-2)
        assert jnp.allclose(res["output"][..., 4], ref["output"][..., 4], atol=0.3)
    else:
        assert jnp.allclose(res["embedding"], ref["embedding"], atol=5e-3, rtol=5e-3)
        assert jnp.allclose(res["output"], ref["output"], atol=5e-3, rtol=5e-3)

    print("KERNEL_OK")
</pallas_src>

<mosaic_0001>
module attributes {stable_mosaic.version = 11 : i64} {
  func.func @_embedding_kernel(%arg0: i32, %arg1: memref<4x128xf32, #tpu.memory_space<vmem>>, %arg2: memref<32x4xf32, #tpu.memory_space<vmem>>, %arg3: memref<2x32x32xf32, #tpu.memory_space<vmem>>, %arg4: memref<16x32xf32, #tpu.memory_space<vmem>>, %arg5: memref<8x16xf32, #tpu.memory_space<vmem>>, %arg6: memref<32x7xf32, #tpu.memory_space<vmem>>, %arg7: memref<16x3xf32, #tpu.memory_space<vmem>>, %arg8: memref<8x1xf32, #tpu.memory_space<vmem>>, %arg9: memref<24x128xf32, #tpu.memory_space<vmem>>) attributes {dimension_semantics = [#tpu.dimension_semantics<parallel>], iteration_bounds = array<i64: 1>, scalar_prefetch = 0 : i64, scratch_operands = 0 : i64, tpu.core_type = #tpu.core_type<tc>, window_params = [{transform_indices = @transform_0, window_bounds = array<i64: 4, 128>}, {pipeline_mode = #tpu.pipeline_mode<synchronous>, transform_indices = @transform_1, window_bounds = array<i64: 32, 4>}, {pipeline_mode = #tpu.pipeline_mode<synchronous>, transform_indices = @transform_2, window_bounds = array<i64: 2, 32, 32>}, {pipeline_mode = #tpu.pipeline_mode<synchronous>, transform_indices = @transform_3, window_bounds = array<i64: 16, 32>}, {pipeline_mode = #tpu.pipeline_mode<synchronous>, transform_indices = @transform_4, window_bounds = array<i64: 8, 16>}, {pipeline_mode = #tpu.pipeline_mode<synchronous>, transform_indices = @transform_5, window_bounds = array<i64: 32, 7>}, {pipeline_mode = #tpu.pipeline_mode<synchronous>, transform_indices = @transform_6, window_bounds = array<i64: 16, 3>}, {pipeline_mode = #tpu.pipeline_mode<synchronous>, transform_indices = @transform_7, window_bounds = array<i64: 8, 1>}, {transform_indices = @transform_8, window_bounds = array<i64: 24, 128>}]} {
    %c0 = arith.constant 0 : index
    %c0_0 = arith.constant 0 : index
    %0 = vector.load %arg1[%c0, %c0_0] : memref<4x128xf32, #tpu.memory_space<vmem>>, vector<4x128xf32>
    %c0_1 = arith.constant 0 : index
    %c0_2 = arith.constant 0 : index
    %1 = vector.load %arg2[%c0_1, %c0_2] : memref<32x4xf32, #tpu.memory_space<vmem>>, vector<32x4xf32>
    %cst = arith.constant dense<0.000000e+00> : vector<32x128xf32>
    %2 = tpu.matmul %1, %0, %cst {dimension_numbers = #tpu.dot_dimension_numbers<[1], [0], [0], [1], [0, 0, 1, 1], [], []>} : vector<32x4xf32>, vector<4x128xf32>, vector<32x128xf32> -> vector<32x128xf32>
    %c0_3 = arith.constant 0 : index
    %c0_4 = arith.constant 0 : index
    %3 = vector.load %arg6[%c0_3, %c0_4] : memref<32x7xf32, #tpu.memory_space<vmem>>, vector<32x1xf32>
    %4 = vector.broadcast %3 : vector<32x1xf32> to vector<32x128xf32>
    %5 = arith.addf %2, %4 : vector<32x128xf32>
    %cst_5 = arith.constant 0.000000e+00 : f32
    %6 = vector.broadcast %cst_5 : f32 to vector<32x128xf32>
    %7 = arith.minimumf %5, %6 : vector<32x128xf32>
    %8 = math.exp %7 : vector<32x128xf32>
    %cst_6 = arith.constant 1.000000e+00 : f32
    %9 = vector.broadcast %cst_6 : f32 to vector<32x128xf32>
    %10 = arith.subf %8, %9 : vector<32x128xf32>
    %cst_7 = arith.constant 0.000000e+00 : f32
    %11 = vector.broadcast %cst_7 : f32 to vector<32x128xf32>
    %12 = arith.cmpf ogt, %5, %11 : vector<32x128xf32>
    %cst_8 = arith.constant 1.67326319 : f32
    %13 = vector.broadcast %cst_8 : f32 to vector<32x128xf32>
    %14 = arith.mulf %13, %10 : vector<32x128xf32>
    %15 = arith.select %12, %5, %14 : vector<32x128xi1>, vector<32x128xf32>
    %cst_9 = arith.constant 1.05070102 : f32
    %16 = vector.broadcast %cst_9 : f32 to vector<32x128xf32>
    %17 = arith.mulf %16, %15 : vector<32x128xf32>
    %c0_10 = arith.constant 0 : index
    %c0_11 = arith.constant 0 : index
    %c0_12 = arith.constant 0 : index
    %18 = vector.load %arg3[%c0_10, %c0_11, %c0_12] : memref<2x32x32xf32, #tpu.memory_space<vmem>>, vector<1x32x32xf32>
    %19 = vector.shape_cast %18 : vector<1x32x32xf32> to vector<32x32xf32>
    %cst_13 = arith.constant dense<0.000000e+00> : vector<32x128xf32>
    %20 = tpu.matmul %19, %17, %cst_13 {dimension_numbers = #tpu.dot_dimension_numbers<[1], [0], [0], [1], [0, 0, 1, 1], [], []>} : vector<32x32xf32>, vector<32x128xf32>, vector<32x128xf32> -> vector<32x128xf32>
    %c0_14 = arith.constant 0 : index
    %c1 = arith.constant 1 : index
    %21 = vector.load %arg6[%c0_14, %c1] : memref<32x7xf32, #tpu.memory_space<vmem>>, vector<32x1xf32>
    %22 = vector.broadcast %21 : vector<32x1xf32> to vector<32x128xf32>
    %23 = arith.addf %20, %22 : vector<32x128xf32>
    %c0_15 = arith.constant 0 : index
    %c2 = arith.constant 2 : index
    %24 = vector.load %arg6[%c0_15, %c2] : memref<32x7xf32, #tpu.memory_space<vmem>>, vector<32x1xf32>
    %c0_16 = arith.constant 0 : index
    %c3 = arith.constant 3 : index
    %25 = vector.load %arg6[%c0_16, %c3] : memref<32x7xf32, #tpu.memory_space<vmem>>, vector<32x1xf32>
    %cst_17 = arith.constant dense<0.000000e+00> : vector<128xf32>
    %26 = vector.multi_reduction <add>, %23, %cst_17 [0] : vector<32x128xf32> to vector<128xf32>
    %27 = vector.shape_cast %26 : vector<128xf32> to vector<1x128xf32>
    %cst_18 = arith.constant 3.200000e+01 : f32
    %28 = vector.broadcast %cst_18 : f32 to vector<1x128xf32>
    %29 = arith.divf %27, %28 : vector<1x128xf32>
    %30 = vector.broadcast %29 : vector<1x128xf32> to vector<32x128xf32>
    %31 = arith.subf %23, %30 : vector<32x128xf32>
    %32 = arith.mulf %31, %31 : vector<32x128xf32>
    %cst_19 = arith.constant dense<0.000000e+00> : vector<128xf32>
    %33 = vector.multi_reduction <add>, %32, %cst_19 [0] : vector<32x128xf32> to vector<128xf32>
    %34 = vector.shape_cast %33 : vector<128xf32> to vector<1x128xf32>
    %cst_20 = arith.constant 3.200000e+01 : f32
    %35 = vector.broadcast %cst_20 : f32 to vector<1x128xf32>
    %36 = arith.divf %34, %35 : vector<1x128xf32>
    %cst_21 = arith.constant 9.99999974E-6 : f32
    %37 = vector.broadcast %cst_21 : f32 to vector<1x128xf32>
    %38 = arith.addf %36, %37 : vector<1x128xf32>
    %39 = math.rsqrt %38 : vector<1x128xf32>
    %40 = vector.broadcast %39 : vector<1x128xf32> to vector<32x128xf32>
    %41 = arith.mulf %31, %40 : vector<32x128xf32>
    %42 = vector.broadcast %24 : vector<32x1xf32> to vector<32x128xf32>
    %43 = arith.mulf %41, %42 : vector<32x128xf32>
    %44 = vector.broadcast %25 : vector<32x1xf32> to vector<32x128xf32>
    %45 = arith.addf %43, %44 : vector<32x128xf32>
    %cst_22 = arith.constant 0.000000e+00 : f32
    %46 = vector.broadcast %cst_22 : f32 to vector<32x128xf32>
    %47 = arith.minimumf %45, %46 : vector<32x128xf32>
    %48 = math.exp %47 : vector<32x128xf32>
    %cst_23 = arith.constant 1.000000e+00 : f32
    %49 = vector.broadcast %cst_23 : f32 to vector<32x128xf32>
    %50 = arith.subf %48, %49 : vector<32x128xf32>
    %cst_24 = arith.constant 0.000000e+00 : f32
    %51 = vector.broadcast %cst_24 : f32 to vector<32x128xf32>
    %52 = arith.cmpf ogt, %45, %51 : vector<32x128xf32>
    %cst_25 = arith.constant 1.67326319 : f32
    %53 = vector.broadcast %cst_25 : f32 to vector<32x128xf32>
    %54 = arith.mulf %53, %50 : vector<32x128xf32>
    %55 = arith.select %52, %45, %54 : vector<32x128xi1>, vector<32x128xf32>
    %cst_26 = arith.constant 1.05070102 : f32
    %56 = vector.broadcast %cst_26 : f32 to vector<32x128xf32>
    %57 = arith.mulf %56, %55 : vector<32x128xf32>
    %58 = arith.addf %17, %57 : vector<32x128xf32>
    %c1_27 = arith.constant 1 : index
    %c0_28 = arith.constant 0 : index
    %c0_29 = arith.constant 0 : index
    %59 = vector.load %arg3[%c1_27, %c0_28, %c0_29] : memref<2x32x32xf32, #tpu.memory_space<vmem>>, vector<1x32x32xf32>
    %60 = vector.shape_cast %59 : vector<1x32x32xf32> to vector<32x32xf32>
    %cst_30 = arith.constant dense<0.000000e+00> : vector<32x128xf32>
    %61 = tpu.matmul %60, %58, %cst_30 {dimension_numbers = #tpu.dot_dimension_numbers<[1], [0], [0], [1], [0, 0, 1, 1], [], []>} : vector<32x32xf32>, vector<32x128xf32>, vector<32x128xf32> -> vector<32x128xf32>
    %c0_31 = arith.constant 0 : index
    %c4 = arith.constant 4 : index
    %62 = vector.load %arg6[%c0_31, %c4] : memref<32x7xf32, #tpu.memory_space<vmem>>, vector<32x1xf32>
    %63 = vector.broadcast %62 : vector<32x1xf32> to vector<32x128xf32>
    %64 = arith.addf %61, %63 : vector<32x128xf32>
    %c0_32 = arith.constant 0 : index
    %c5 = arith.constant 5 : index
    %65 = vector.load %arg6[%c0_32, %c5] : memref<32x7xf32, #tpu.memory_space<vmem>>, vector<32x1xf32>
    %c0_33 = arith.constant 0 : index
    %c6 = arith.constant 6 : index
    %66 = vector.load %arg6[%c0_33, %c6] : memref<32x7xf32, #tpu.memory_space<vmem>>, vector<32x1xf32>
    %cst_34 = arith.constant dense<0.000000e+00> : vector<128xf32>
    %67 = vector.multi_reduction <add>, %64, %cst_34 [0] : vector<32x128xf32> to vector<128xf32>
    %68 = vector.shape_cast %67 : vector<128xf32> to vector<1x128xf32>
    %cst_35 = arith.constant 3.200000e+01 : f32
    %69 = vector.broadcast %cst_35 : f32 to vector<1x128xf32>
    %70 = arith.divf %68, %69 : vector<1x128xf32>
    %71 = vector.broadcast %70 : vector<1x128xf32> to vector<32x128xf32>
    %72 = arith.subf %64, %71 : vector<32x128xf32>
    %73 = arith.mulf %72, %72 : vector<32x128xf32>
    %cst_36 = arith.constant dense<0.000000e+00> : vector<128xf32>
    %74 = vector.multi_reduction <add>, %73, %cst_36 [0] : vector<32x128xf32> to vector<128xf32>
    %75 = vector.shape_cast %74 : vector<128xf32> to vector<1x128xf32>
    %cst_37 = arith.constant 3.200000e+01 : f32
    %76 = vector.broadcast %cst_37 : f32 to vector<1x128xf32>
    %77 = arith.divf %75, %76 : vector<1x128xf32>
    %cst_38 = arith.constant 9.99999974E-6 : f32
    %78 = vector.broadcast %cst_38 : f32 to vector<1x128xf32>
    %79 = arith.addf %77, %78 : vector<1x128xf32>
    %80 = math.rsqrt %79 : vector<1x128xf32>
    %81 = vector.broadcast %80 : vector<1x128xf32> to vector<32x128xf32>
    %82 = arith.mulf %72, %81 : vector<32x128xf32>
    %83 = vector.broadcast %65 : vector<32x1xf32> to vector<32x128xf32>
    %84 = arith.mulf %82, %83 : vector<32x128xf32>
    %85 = vector.broadcast %66 : vector<32x1xf32> to vector<32x128xf32>
    %86 = arith.addf %84, %85 : vector<32x128xf32>
    %cst_39 = arith.constant 0.000000e+00 : f32
    %87 = vector.broadcast %cst_39 : f32 to vector<32x128xf32>
    %88 = arith.minimumf %86, %87 : vector<32x128xf32>
    %89 = math.exp %88 : vector<32x128xf32>
    %cst_40 = arith.constant 1.000000e+00 : f32
    %90 = vector.broadcast %cst_40 : f32 to vector<32x128xf32>
    %91 = arith.subf %89, %90 : vector<32x128xf32>
    %cst_41 = arith.constant 0.000000e+00 : f32
    %92 = vector.broadcast %cst_41 : f32 to vector<32x128xf32>
    %93 = arith.cmpf ogt, %86, %92 : vector<32x128xf32>
    %cst_42 = arith.constant 1.67326319 : f32
    %94 = vector.broadcast %cst_42 : f32 to vector<32x128xf32>
    %95 = arith.mulf %94, %91 : vector<32x128xf32>
    %96 = arith.select %93, %86, %95 : vector<32x128xi1>, vector<32x128xf32>
    %cst_43 = arith.constant 1.05070102 : f32
    %97 = vector.broadcast %cst_43 : f32 to vector<32x128xf32>
    %98 = arith.mulf %97, %96 : vector<32x128xf32>
    %99 = arith.addf %58, %98 : vector<32x128xf32>
    %c0_44 = arith.constant 0 : index
    %c0_45 = arith.constant 0 : index
    %100 = vector.load %arg4[%c0_44, %c0_45] : memref<16x32xf32, #tpu.memory_space<vmem>>, vector<16x32xf32>
    %cst_46 = arith.constant dense<0.000000e+00> : vector<16x128xf32>
    %101 = tpu.matmul %100, %99, %cst_46 {dimension_numbers = #tpu.dot_dimension_numbers<[1], [0], [0], [1], [0, 0, 1, 1], [], []>} : vector<16x32xf32>, vector<32x128xf32>, vector<16x128xf32> -> vector<16x128xf32>
    %c0_47 = arith.constant 0 : index
    %c0_48 = arith.constant 0 : index
    %102 = vector.load %arg7[%c0_47, %c0_48] : memref<16x3xf32, #tpu.memory_space<vmem>>, vector<16x1xf32>
    %103 = vector.broadcast %102 : vector<16x1xf32> to vector<16x128xf32>
    %104 = arith.addf %101, %103 : vector<16x128xf32>
    %c0_49 = arith.constant 0 : index
    %c1_50 = arith.constant 1 : index
    %105 = vector.load %arg7[%c0_49, %c1_50] : memref<16x3xf32, #tpu.memory_space<vmem>>, vector<16x1xf32>
    %c0_51 = arith.constant 0 : index
    %c2_52 = arith.constant 2 : index
    %106 = vector.load %arg7[%c0_51, %c2_52] : memref<16x3xf32, #tpu.memory_space<vmem>>, vector<16x1xf32>
    %cst_53 = arith.constant dense<0.000000e+00> : vector<128xf32>
    %107 = vector.multi_reduction <add>, %104, %cst_53 [0] : vector<16x128xf32> to vector<128xf32>
    %108 = vector.shape_cast %107 : vector<128xf32> to vector<1x128xf32>
    %cst_54 = arith.constant 1.600000e+01 : f32
    %109 = vector.broadcast %cst_54 : f32 to vector<1x128xf32>
    %110 = arith.divf %108, %109 : vector<1x128xf32>
    %111 = vector.broadcast %110 : vector<1x128xf32> to vector<16x128xf32>
    %112 = arith.subf %104, %111 : vector<16x128xf32>
    %113 = arith.mulf %112, %112 : vector<16x128xf32>
    %cst_55 = arith.constant dense<0.000000e+00> : vector<128xf32>
    %114 = vector.multi_reduction <add>, %113, %cst_55 [0] : vector<16x128xf32> to vector<128xf32>
    %115 = vector.shape_cast %114 : vector<128xf32> to vector<1x128xf32>
    %cst_56 = arith.constant 1.600000e+01 : f32
    %116 = vector.broadcast %cst_56 : f32 to vector<1x128xf32>
    %117 = arith.divf %115, %116 : vector<1x128xf32>
    %cst_57 = arith.constant 9.99999974E-6 : f32
    %118 = vector.broadcast %cst_57 : f32 to vector<1x128xf32>
    %119 = arith.addf %117, %118 : vector<1x128xf32>
    %120 = math.rsqrt %119 : vector<1x128xf32>
    %121 = vector.broadcast %120 : vector<1x128xf32> to vector<16x128xf32>
    %122 = arith.mulf %112, %121 : vector<16x128xf32>
    %123 = vector.broadcast %105 : vector<16x1xf32> to vector<16x128xf32>
    %124 = arith.mulf %122, %123 : vector<16x128xf32>
    %125 = vector.broadcast %106 : vector<16x1xf32> to vector<16x128xf32>
    %126 = arith.addf %124, %125 : vector<16x128xf32>
    %c0_58 = arith.constant 0 : index
    %c0_59 = arith.constant 0 : index
    %127 = vector.load %arg9[%c0_58, %c0_59] : memref<24x128xf32, #tpu.memory_space<vmem>>, vector<16x128xf32>
    tpu.vector_store %arg9[%c0_58, %c0_59], %126 {strides = array<i32>} : memref<24x128xf32, #tpu.memory_space<vmem>>, vector<16x128xf32>,
    %c0_60 = arith.constant 0 : index
    %c0_61 = arith.constant 0 : index
    %128 = vector.load %arg5[%c0_60, %c0_61] : memref<8x16xf32, #tpu.memory_space<vmem>>, vector<8x16xf32>
    %cst_62 = arith.constant dense<0.000000e+00> : vector<8x128xf32>
    %129 = tpu.matmul %128, %126, %cst_62 {dimension_numbers = #tpu.dot_dimension_numbers<[1], [0], [0], [1], [0, 0, 1, 1], [], []>} : vector<8x16xf32>, vector<16x128xf32>, vector<8x128xf32> -> vector<8x128xf32>
    %c0_63 = arith.constant 0 : index
    %c0_64 = arith.constant 0 : index
    %130 = vector.load %arg8[%c0_63, %c0_64] : memref<8x1xf32, #tpu.memory_space<vmem>>, vector<8x1xf32>
    %131 = vector.broadcast %130 : vector<8x1xf32> to vector<8x128xf32>
    %132 = arith.addf %129, %131 : vector<8x128xf32>
    %c16 = arith.constant 16 : index
    %c0_65 = arith.constant 0 : index
    %133 = vector.load %arg9[%c16, %c0_65] : memref<24x128xf32, #tpu.memory_space<vmem>>, vector<8x128xf32>
    tpu.vector_store %arg9[%c16, %c0_65], %132 {strides = array<i32>} : memref<24x128xf32, #tpu.memory_space<vmem>>, vector<8x128xf32>,
    %134 = vector.extract_strided_slice %132 {offsets = [5, 0], sizes = [2, 128], strides = [1, 1]} : vector<8x128xf32> to vector<2x128xf32>
    %135 = vector.extract_strided_slice %0 {offsets = [0, 0], sizes = [2, 128], strides = [1, 1]} : vector<4x128xf32> to vector<2x128xf32>
    %136 = arith.subf %134, %135 : vector<2x128xf32>
    %c21 = arith.constant 21 : index
    %c0_66 = arith.constant 0 : index
    %137 = vector.load %arg9[%c21, %c0_66] : memref<24x128xf32, #tpu.memory_space<vmem>>, vector<2x128xf32>
    tpu.vector_store %arg9[%c21, %c0_66], %136 {strides = array<i32>} : memref<24x128xf32, #tpu.memory_space<vmem>>, vector<2x128xf32>,
    return
  }
  func.func @transform_0(%arg0: i32) -> (i32, i32) {
    %c0_i32 = arith.constant 0 : i32
    %c0_i32_0 = arith.constant 0 : i32
    return %c0_i32, %arg0 : i32, i32
  }
  func.func @transform_1(%arg0: i32) -> (i32, i32) {
    %c0_i32 = arith.constant 0 : i32
    %c0_i32_0 = arith.constant 0 : i32
    %c0_i32_1 = arith.constant 0 : i32
    return %c0_i32, %c0_i32_0 : i32, i32
  }
  func.func @transform_2(%arg0: i32) -> (i32, i32, i32) {
    %c0_i32 = arith.constant 0 : i32
    %c0_i32_0 = arith.constant 0 : i32
    %c0_i32_1 = arith.constant 0 : i32
    %c0_i32_2 = arith.constant 0 : i32
    return %c0_i32, %c0_i32_0, %c0_i32_1 : i32, i32, i32
  }
  func.func @transform_3(%arg0: i32) -> (i32, i32) {
    %c0_i32 = arith.constant 0 : i32
    %c0_i32_0 = arith.constant 0 : i32
    %c0_i32_1 = arith.constant 0 : i32
    return %c0_i32, %c0_i32_0 : i32, i32
  }
  func.func @transform_4(%arg0: i32) -> (i32, i32) {
    %c0_i32 = arith.constant 0 : i32
    %c0_i32_0 = arith.constant 0 : i32
    %c0_i32_1 = arith.constant 0 : i32
    return %c0_i32, %c0_i32_0 : i32, i32
  }
  func.func @transform_5(%arg0: i32) -> (i32, i32) {
    %c0_i32 = arith.constant 0 : i32
    %c0_i32_0 = arith.constant 0 : i32
    %c0_i32_1 = arith.constant 0 : i32
    return %c0_i32, %c0_i32_0 : i32, i32
  }
  func.func @transform_6(%arg0: i32) -> (i32, i32) {
    %c0_i32 = arith.constant 0 : i32
    %c0_i32_0 = arith.constant 0 : i32
    %c0_i32_1 = arith.constant 0 : i32
    return %c0_i32, %c0_i32_0 : i32, i32
  }
  func.func @transform_7(%arg0: i32) -> (i32, i32) {
    %c0_i32 = arith.constant 0 : i32
    %c0_i32_0 = arith.constant 0 : i32
    %c0_i32_1 = arith.constant 0 : i32
    return %c0_i32, %c0_i32_0 : i32, i32
  }
  func.func @transform_8(%arg0: i32) -> (i32, i32) {
    %c0_i32 = arith.constant 0 : i32
    %c0_i32_0 = arith.constant 0 : i32
    return %c0_i32, %arg0 : i32, i32
  }
}

</mosaic_0001>

<llo_original>
// kernel: tpu_custom_call.1
$region0: #{tpu_custom_call.1}
  #allocation0 [shape = 'u32[]', space=smem, size = 0x4, offset = 0x4, fixed_abs, tag = 'smem constant byte address 0x4 - core index']
  #allocation1 [shape = 'u32[72,128]{1,0:T(1,128)}', space=vmem, size = 0x9000, scoped, tag = 'internal scratch']
  %s0 = inlined_call_operand.vmem [shape: f32[4,128], index: 0, kind: input, shape index: {}]
  %s1 = inlined_call_operand.vmem [shape: f32[32,4], index: 1, kind: input, shape index: {}]
  %s2 = inlined_call_operand.vmem [shape: f32[2,32,32], index: 2, kind: input, shape index: {}]
  %s3 = inlined_call_operand.vmem [shape: f32[16,32], index: 3, kind: input, shape index: {}]
  %s4 = inlined_call_operand.vmem [shape: f32[8,16], index: 4, kind: input, shape index: {}]
  %s5 = inlined_call_operand.vmem [shape: f32[32,7], index: 5, kind: input, shape index: {}]
  %s6 = inlined_call_operand.vmem [shape: f32[16,3], index: 6, kind: input, shape index: {}]
  %s7 = inlined_call_operand.vmem [shape: f32[8,1], index: 7, kind: input, shape index: {}]
  %s8 = inlined_call_operand.hbm [shape: f32[24,128], index: 8, kind: output, shape index: {}]
  %s9 = sld [smem:[#allocation0]]
  $region42: #{tpu_custom_call.1} parent=0
    _
  %s11 = ssub.s32 1, %s9
  %s12 = scalar_select 0, %s11, %s9
  $region1: #{tpu_custom_call.1} parent=0
    #allocation2 [shape = 'u8[12288]{0}', space=vmem, size = 0x3000, scoped, tag = 'output window, operand 0, single buffered']
    #allocation3 [shape = 's32[1]{0}', space=sflag, size = 0x4, scoped, tag = 'scoped memory for tpu_custom_call.1']
    %13 = vsyncpa [#allocation3], 0
    // Predicated region
    $region2: #{tpu_custom_call.1} parent=1 // pred_check
      _
    $region3: #{tpu_custom_call.1} parent=1 // pred_check_branch
      %15 = sbr.rel (0) target = $region5
    $region4: #{tpu_custom_call.1} parent=1 // pred_region
      _
    $region5: #{tpu_custom_call.1} parent=1 // pred_fallthru
      _
    // Predicated region
    $region6: #{tpu_custom_call.1} parent=1 // pred_check
      _
    $region7: #{tpu_custom_call.1} parent=1 // pred_check_branch
      %17 = sbr.rel (0) target = $region9
    $region8: #{tpu_custom_call.1} parent=1 // pred_region
      _
    $region9: #{tpu_custom_call.1} parent=1 // pred_fallthru
      _
    // Predicated region
    $region10: #{tpu_custom_call.1} parent=1 // pred_check
      _
    $region11: #{tpu_custom_call.1} parent=1 // pred_check_branch
      %19 = sbr.rel (0) target = $region13
    $region12: #{tpu_custom_call.1} parent=1 // pred_region
      _
    $region13: #{tpu_custom_call.1} parent=1 // pred_fallthru
      _
    // Predicated region
    $region14: #{tpu_custom_call.1} parent=1 // pred_check
      _
    $region15: #{tpu_custom_call.1} parent=1 // pred_check_branch
      %21 = sbr.rel (0) target = $region17
    $region16: #{tpu_custom_call.1} parent=1 // pred_region
      _
    $region17: #{tpu_custom_call.1} parent=1 // pred_fallthru
      _
    // Predicated region
    $region18: #{tpu_custom_call.1} parent=1 // pred_check
      _
    $region19: #{tpu_custom_call.1} parent=1 // pred_check_branch
      %23 = sbr.rel (0) target = $region21
    $region20: #{tpu_custom_call.1} parent=1 // pred_region
      _
    $region21: #{tpu_custom_call.1} parent=1 // pred_fallthru
      _
    // Predicated region
    $region22: #{tpu_custom_call.1} parent=1 // pred_check
      _
    $region23: #{tpu_custom_call.1} parent=1 // pred_check_branch
      %25 = sbr.rel (0) target = $region25
    $region24: #{tpu_custom_call.1} parent=1 // pred_region
      _
    $region25: #{tpu_custom_call.1} parent=1 // pred_fallthru
      _
    // Predicated region
    $region26: #{tpu_custom_call.1} parent=1 // pred_check
      _
    $region27: #{tpu_custom_call.1} parent=1 // pred_check_branch
      %27 = sbr.rel (0) target = $region29
    $region28: #{tpu_custom_call.1} parent=1 // pred_region
      _
    $region29: #{tpu_custom_call.1} parent=1 // pred_fallthru
      _
    // Predicated region
    $region30: #{tpu_custom_call.1} parent=1 // pred_check
      _
    $region31: #{tpu_custom_call.1} parent=1 // pred_check_branch
      %29 = sbr.rel (0) target = $region33
    $region32: #{tpu_custom_call.1} parent=1 // pred_region
      _
    $region33: #{tpu_custom_call.1} parent=1 // pred_fallthru
      _
    %v30 = vld [vmem:[%s0] sm:$0xf]
    %v31 = vld [vmem:[%s1] sm:$0xff]
    %v32 = vld [vmem:[%s1 + $0x8] sm:$0xff]
    %v33 = vld [vmem:[%s1 + $0x10] sm:$0xff]
    %v34 = vld [vmem:[%s1 + $0x18] sm:$0xff]
    %v35 = vld [vmem:[%s5] sm:$0xff]
    %v36 = vld [vmem:[%s5 + $0x8] sm:$0xff]
    %v37 = vld [vmem:[%s5 + $0x10] sm:$0xff]
    %v38 = vld [vmem:[%s5 + $0x18] sm:$0xff]
    %40 = vset.pattern.permute.xlu0 0
    %41 = vperm.xlu0 %40, %v35
    %v42 = vpop.permute.xlu0 %41
    %45 = vset.pattern.permute.xlu0 0
    %46 = vperm.xlu0 %45, %v36
    %v47 = vpop.permute.xlu0 %46
    %50 = vset.pattern.permute.xlu0 0
    %51 = vperm.xlu0 %50, %v37
    %v52 = vpop.permute.xlu0 %51
    %55 = vset.pattern.permute.xlu0 0
    %56 = vperm.xlu0 %55, %v38
    %v57 = vpop.permute.xlu0 %56
    %vm59 = vcmask 31744
    %v61 = vsel %vm59, %v31, 0
    %v64 = vsel %vm59, %v32, 0
    %v67 = vsel %vm59, %v33, 0
    %v70 = vsel %vm59, %v34, 0
    %vm72 = vcmask 1043456
    %v74 = vsel %vm72, %v30, 0
    %76 = vmatpush.msra.mxu0 0.0
    %77 = vmatpush.msra.mxu0 0.0
    %78 = vmatpush.msra.mxu0 0.0
    %79 = vmatpush.msra.mxu0 0.0
    %80 = vmatpush.msra.mxu0 0.0
    %81 = vmatpush.msra.mxu0 0.0
    %82 = vmatpush.msra.mxu0 0.0
    %83 = vmatpush.msra.mxu0 0.0
    %84 = vmatpush.msra.mxu0 0.0
    %85 = vmatpush.msra.mxu0 0.0
    %86 = vmatpush.msra.mxu0 0.0
    %87 = vmatpush.msra.mxu0 0.0
    %88 = vmatpush.msra.mxu0 0.0
    %89 = vmatpush.msra.mxu0 0.0
    %90 = vmatpush.msra.mxu0 0.0
    %91 = vmatpush.msra.mxu0 %v74
    %92 = vmatmul.f32.gmra.mxu0 %v61
    %v93 = vpop.f32.mrf.mxu0
    %v94 = vadd.f32 %v42, %v93
    %95 = vmatmul.f32.gmra.mxu0 %v64
    %v96 = vpop.f32.mrf.mxu0
    %v97 = vadd.f32 %v47, %v96
    %98 = vmatmul.f32.gmra.mxu0 %v67
    %v99 = vpop.f32.mrf.mxu0
    %v100 = vadd.f32 %v52, %v99
    %101 = vmatmul.f32.gmra.mxu0 %v70
    %v102 = vpop.f32.mrf.mxu0
    %v103 = vadd.f32 %v57, %v102
    %104 = vdwg.mxu0
    %v105 = vmin.f32 %v94, 0.0
    %v106 = vmin.f32 %v97, 0.0
    %v107 = vmin.f32 %v100, 0.0
    %v108 = vmin.f32 %v103, 0.0
    %v109 = vmul.f32 %v105, 1.442695
    %v110 = vpow.pop %v109
    %v111 = vmul.f32 %v106, 1.442695
    %v112 = vpow.pop %v111
    %v113 = vmul.f32 %v107, 1.442695
    %v114 = vpow.pop %v113
    %v115 = vmul.f32 %v108, 1.442695
    %v116 = vpow.pop %v115
    %v117 = vsub.f32 %v110, 1.0
    %v118 = vsub.f32 %v112, 1.0
    %v119 = vsub.f32 %v114, 1.0
    %v120 = vsub.f32 %v116, 1.0
    %vm121 = vcmp.gt.f32.partialorder %v94, 0.0
    %vm122 = vcmp.gt.f32.partialorder %v97, 0.0
    %vm123 = vcmp.gt.f32.partialorder %v100, 0.0
    %vm124 = vcmp.gt.f32.partialorder %v103, 0.0
    %v125 = vmul.f32 %v117, 1.6732632
    %v126 = vmul.f32 %v118, 1.6732632
    %v127 = vmul.f32 %v119, 1.6732632
    %v128 = vmul.f32 %v120, 1.6732632
    %v129 = vsel %vm121, %v94, %v125
    %v130 = vsel %vm122, %v97, %v126
    %v131 = vsel %vm123, %v100, %v127
    %v132 = vsel %vm124, %v103, %v128
    %v133 = vmul.f32 %v129, 1.050701
    %v134 = vmul.f32 %v130, 1.050701
    %v135 = vmul.f32 %v131, 1.050701
    %v136 = vmul.f32 %v132, 1.050701
    %v137 = vld [vmem:[%s2] sm:$0xff]
    %v138 = vld [vmem:[%s2 + $0x8] sm:$0xff]
    %v139 = vld [vmem:[%s2 + $0x10] sm:$0xff]
    %v140 = vld [vmem:[%s2 + $0x18] sm:$0xff]
    %141 = vset.pattern.permute.xlu0 1
    %142 = vperm.xlu0 %141, %v35
    %v143 = vpop.permute.xlu0 %142
    %145 = vset.pattern.permute.xlu0 1
    %146 = vperm.xlu0 %145, %v36
    %v147 = vpop.permute.xlu0 %146
    %149 = vset.pattern.permute.xlu0 1
    %150 = vperm.xlu0 %149, %v37
    %v151 = vpop.permute.xlu0 %150
    %153 = vset.pattern.permute.xlu0 1
    %154 = vperm.xlu0 %153, %v38
    %v155 = vpop.permute.xlu0 %154
    %vm157 = vcmask 261120
    %v159 = vsel %vm157, %v137, 0
    %v162 = vsel %vm157, %v138, 0
    %v165 = vsel %vm157, %v139, 0
    %v168 = vsel %vm157, %v140, 0
    %170 = vmatpush.msra.mxu0 0.0
    %171 = vmatpush.msra.mxu0 0.0
    %172 = vmatpush.msra.mxu0 0.0
    %173 = vmatpush.msra.mxu0 0.0
    %174 = vmatpush.msra.mxu0 0.0
    %175 = vmatpush.msra.mxu0 0.0
    %176 = vmatpush.msra.mxu0 0.0
    %177 = vmatpush.msra.mxu0 0.0
    %178 = vmatpush.msra.mxu0 0.0
    %179 = vmatpush.msra.mxu0 0.0
    %180 = vmatpush.msra.mxu0 0.0
    %181 = vmatpush.msra.mxu0 0.0
    %182 = vmatpush.msra.mxu0 %v136
    %183 = vmatpush.msra.mxu0 %v135
    %184 = vmatpush.msra.mxu0 %v134
    %185 = vmatpush.msra.mxu0 %v133
    %186 = vmatmul.f32.gmra.mxu0 %v159
    %v187 = vpop.f32.mrf.mxu0
    %v188 = vadd.f32 %v143, %v187
    %189 = vmatmul.f32.gmra.mxu0 %v162
    %v190 = vpop.f32.mrf.mxu0
    %v191 = vadd.f32 %v147, %v190
    %192 = vmatmul.f32.gmra.mxu0 %v165
    %v193 = vpop.f32.mrf.mxu0
    %v194 = vadd.f32 %v151, %v193
    %195 = vmatmul.f32.gmra.mxu0 %v168
    %v196 = vpop.f32.mrf.mxu0
    %v197 = vadd.f32 %v155, %v196
    %198 = vdwg.mxu0
    %v199 = vadd.f32 %v188, %v191
    %v200 = vadd.f32 %v199, %v194
    %v201 = vadd.f32 %v200, %v197
    %v202 = vrot.slane %v201, 4
    %v203 = vadd.f32 %v201, %v202
    %v204 = vrot.slane %v203, 2
    %v205 = vadd.f32 %v203, %v204
    %v206 = vrot.slane %v205, 1
    %v207 = vadd.f32 %v205, %v206
    %v208 = vrcp.pop 32.0
    %v209 = vmul.f32 32.0, %v208
    %v210 = vsub.f32 1.0, %v209
    %v211 = vmul.f32 %v208, %v210
    %v212 = vadd.f32 %v208, %v211
    %vm213 = vweird.f32 %v208
    %v214 = vsel %vm213, %v208, %v212
    %v215 = vmul.f32 %v207, %v214
    %v216 = vsub.f32 %v188, %v215
    %v217 = vsub.f32 %v191, %v215
    %v218 = vsub.f32 %v194, %v215
    %v219 = vsub.f32 %v197, %v215
    %v220 = vmul.f32 %v216, %v216
    %v221 = vmul.f32 %v217, %v217
    %v222 = vmul.f32 %v218, %v218
    %v223 = vmul.f32 %v219, %v219
    %v224 = vadd.f32 %v220, %v221
    %v225 = vadd.f32 %v224, %v222
    %v226 = vadd.f32 %v225, %v223
    %v227 = vrot.slane %v226, 4
    %v228 = vadd.f32 %v226, %v227
    %v229 = vrot.slane %v228, 2
    %v230 = vadd.f32 %v228, %v229
    %v231 = vrot.slane %v230, 1
    %v232 = vadd.f32 %v230, %v231
    %v233 = vmul.f32 %v232, %v214
    %v234 = vadd.f32 %v233, 1e-05
    %v235 = vrsqrt.pop %v234
    %v236 = vmul.f32 %v235, %v234
    %v237 = vmul.f32 %v236, %v235
    %v238 = vmul.f32 0.5, %v237
    %v239 = vsub.f32 1.5, %v238
    %v240 = vmul.f32 %v235, %v239
    %vm241 = vweird.f32 %v234
    %vm242 = vweird.f32 %v235
    %vm243 = vmor %vm241, %vm242
    %v244 = vsel %vm243, %v235, %v240
    %v245 = vmul.f32 %v216, %v244
    %v246 = vmul.f32 %v217, %v244
    %v247 = vmul.f32 %v218, %v244
    %v248 = vmul.f32 %v219, %v244
    %249 = vset.pattern.permute.xlu0 2
    %250 = vperm.xlu0 %249, %v35
    %v251 = vpop.permute.xlu0 %250
    %253 = vset.pattern.permute.xlu0 2
    %254 = vperm.xlu0 %253, %v36
    %v255 = vpop.permute.xlu0 %254
    %257 = vset.pattern.permute.xlu0 2
    %258 = vperm.xlu0 %257, %v37
    %v259 = vpop.permute.xlu0 %258
    %261 = vset.pattern.permute.xlu0 2
    %262 = vperm.xlu0 %261, %v38
    %v263 = vpop.permute.xlu0 %262
    %v265 = vmul.f32 %v245, %v251
    %v266 = vmul.f32 %v246, %v255
    %v267 = vmul.f32 %v247, %v259
    %v268 = vmul.f32 %v248, %v263
    %269 = vset.pattern.permute.xlu0 3
    %270 = vperm.xlu0 %269, %v35
    %v271 = vpop.permute.xlu0 %270
    %273 = vset.pattern.permute.xlu0 3
    %274 = vperm.xlu0 %273, %v36
    %v275 = vpop.permute.xlu0 %274
    %277 = vset.pattern.permute.xlu0 3
    %278 = vperm.xlu0 %277, %v37
    %v279 = vpop.permute.xlu0 %278
    %281 = vset.pattern.permute.xlu0 3
    %282 = vperm.xlu0 %281, %v38
    %v283 = vpop.permute.xlu0 %282
    %v285 = vadd.f32 %v265, %v271
    %v286 = vadd.f32 %v266, %v275
    %v287 = vadd.f32 %v267, %v279
    %v288 = vadd.f32 %v268, %v283
    %v289 = vmin.f32 %v285, 0.0
    %v290 = vmin.f32 %v286, 0.0
    %v291 = vmin.f32 %v287, 0.0
    %v292 = vmin.f32 %v288, 0.0
    %v293 = vmul.f32 %v289, 1.442695
    %v294 = vpow.pop %v293
    %v295 = vmul.f32 %v290, 1.442695
    %v296 = vpow.pop %v295
    %v297 = vmul.f32 %v291, 1.442695
    %v298 = vpow.pop %v297
    %v299 = vmul.f32 %v292, 1.442695
    %v300 = vpow.pop %v299
    %v301 = vsub.f32 %v294, 1.0
    %v302 = vsub.f32 %v296, 1.0
    %v303 = vsub.f32 %v298, 1.0
    %v304 = vsub.f32 %v300, 1.0
    %vm305 = vcmp.gt.f32.partialorder %v285, 0.0
    %vm306 = vcmp.gt.f32.partialorder %v286, 0.0
    %vm307 = vcmp.gt.f32.partialorder %v287, 0.0
    %vm308 = vcmp.gt.f32.partialorder %v288, 0.0
    %v309 = vmul.f32 %v301, 1.6732632
    %v310 = vmul.f32 %v302, 1.6732632
    %v311 = vmul.f32 %v303, 1.6732632
    %v312 = vmul.f32 %v304, 1.6732632
    %v313 = vsel %vm305, %v285, %v309
    %v314 = vsel %vm306, %v286, %v310
    %v315 = vsel %vm307, %v287, %v311
    %v316 = vsel %vm308, %v288, %v312
    %v317 = vmul.f32 %v313, 1.050701
    %v318 = vmul.f32 %v314, 1.050701
    %v319 = vmul.f32 %v315, 1.050701
    %v320 = vmul.f32 %v316, 1.050701
    %v321 = vadd.f32 %v133, %v317
    %v322 = vadd.f32 %v134, %v318
    %v323 = vadd.f32 %v135, %v319
    %v324 = vadd.f32 %v136, %v320
    %s325 = scalar_lea.vmem %s2, 32
    %v326 = vld [vmem:[%s325] sm:$0xff]
    %v327 = vld [vmem:[%s325 + $0x8] sm:$0xff]
    %v328 = vld [vmem:[%s325 + $0x10] sm:$0xff]
    %v329 = vld [vmem:[%s325 + $0x18] sm:$0xff]
    %330 = vset.pattern.permute.xlu0 4
    %331 = vperm.xlu0 %330, %v35
    %v332 = vpop.permute.xlu0 %331
    %334 = vset.pattern.permute.xlu0 4
    %335 = vperm.xlu0 %334, %v36
    %v336 = vpop.permute.xlu0 %335
    %338 = vset.pattern.permute.xlu0 4
    %339 = vperm.xlu0 %338, %v37
    %v340 = vpop.permute.xlu0 %339
    %342 = vset.pattern.permute.xlu0 4
    %343 = vperm.xlu0 %342, %v38
    %v344 = vpop.permute.xlu0 %343
    %v347 = vsel %vm157, %v326, 0
    %v350 = vsel %vm157, %v327, 0
    %v353 = vsel %vm157, %v328, 0
    %v356 = vsel %vm157, %v329, 0
    %358 = vmatpush.msra.mxu0 0.0
    %359 = vmatpush.msra.mxu0 0.0
    %360 = vmatpush.msra.mxu0 0.0
    %361 = vmatpush.msra.mxu0 0.0
    %362 = vmatpush.msra.mxu0 0.0
    %363 = vmatpush.msra.mxu0 0.0
    %364 = vmatpush.msra.mxu0 0.0
    %365 = vmatpush.msra.mxu0 0.0
    %366 = vmatpush.msra.mxu0 0.0
    %367 = vmatpush.msra.mxu0 0.0
    %368 = vmatpush.msra.mxu0 0.0
    %369 = vmatpush.msra.mxu0 0.0
    %370 = vmatpush.msra.mxu0 %v324
    %371 = vmatpush.msra.mxu0 %v323
    %372 = vmatpush.msra.mxu0 %v322
    %373 = vmatpush.msra.mxu0 %v321
    %374 = vmatmul.f32.gmra.mxu0 %v347
    %v375 = vpop.f32.mrf.mxu0
    %v376 = vadd.f32 %v332, %v375
    %377 = vmatmul.f32.gmra.mxu0 %v350
    %v378 = vpop.f32.mrf.mxu0
    %v379 = vadd.f32 %v336, %v378
    %380 = vmatmul.f32.gmra.mxu0 %v353
    %v381 = vpop.f32.mrf.mxu0
    %v382 = vadd.f32 %v340, %v381
    %383 = vmatmul.f32.gmra.mxu0 %v356
    %v384 = vpop.f32.mrf.mxu0
    %v385 = vadd.f32 %v344, %v384
    %386 = vdwg.mxu0
    %v387 = vadd.f32 %v376, %v379
    %v388 = vadd.f32 %v387, %v382
    %v389 = vadd.f32 %v388, %v385
    %v390 = vrot.slane %v389, 4
    %v391 = vadd.f32 %v389, %v390
    %v392 = vrot.slane %v391, 2
    %v393 = vadd.f32 %v391, %v392
    %v394 = vrot.slane %v393, 1
    %v395 = vadd.f32 %v393, %v394
    %v396 = vmul.f32 %v395, %v214
    %v397 = vsub.f32 %v376, %v396
    %v398 = vsub.f32 %v379, %v396
    %v399 = vsub.f32 %v382, %v396
    %v400 = vsub.f32 %v385, %v396
    %v401 = vmul.f32 %v397, %v397
    %v402 = vmul.f32 %v398, %v398
    %v403 = vmul.f32 %v399, %v399
    %v404 = vmul.f32 %v400, %v400
    %v405 = vadd.f32 %v401, %v402
    %v406 = vadd.f32 %v405, %v403
    %v407 = vadd.f32 %v406, %v404
    %v408 = vrot.slane %v407, 4
    %v409 = vadd.f32 %v407, %v408
    %v410 = vrot.slane %v409, 2
    %v411 = vadd.f32 %v409, %v410
    %v412 = vrot.slane %v411, 1
    %v413 = vadd.f32 %v411, %v412
    %v414 = vmul.f32 %v413, %v214
    %v415 = vadd.f32 %v414, 1e-05
    %v416 = vrsqrt.pop %v415
    %v417 = vmul.f32 %v416, %v415
    %v418 = vmul.f32 %v417, %v416
    %v419 = vmul.f32 0.5, %v418
    %v420 = vsub.f32 1.5, %v419
    %v421 = vmul.f32 %v416, %v420
    %vm422 = vweird.f32 %v415
    %vm423 = vweird.f32 %v416
    %vm424 = vmor %vm422, %vm423
    %v425 = vsel %vm424, %v416, %v421
    %v426 = vmul.f32 %v397, %v425
    %v427 = vmul.f32 %v398, %v425
    %v428 = vmul.f32 %v399, %v425
    %v429 = vmul.f32 %v400, %v425
    %430 = vset.pattern.permute.xlu0 5
    %431 = vperm.xlu0 %430, %v35
    %v432 = vpop.permute.xlu0 %431
    %434 = vset.pattern.permute.xlu0 5
    %435 = vperm.xlu0 %434, %v36
    %v436 = vpop.permute.xlu0 %435
    %438 = vset.pattern.permute.xlu0 5
    %439 = vperm.xlu0 %438, %v37
    %v440 = vpop.permute.xlu0 %439
    %442 = vset.pattern.permute.xlu0 5
    %443 = vperm.xlu0 %442, %v38
    %v444 = vpop.permute.xlu0 %443
    %v446 = vmul.f32 %v426, %v432
    %v447 = vmul.f32 %v427, %v436
    %v448 = vmul.f32 %v428, %v440
    %v449 = vmul.f32 %v429, %v444
    %450 = vset.pattern.permute.xlu0 6
    %451 = vperm.xlu0 %450, %v35
    %v452 = vpop.permute.xlu0 %451
    %454 = vset.pattern.permute.xlu0 6
    %455 = vperm.xlu0 %454, %v36
    %v456 = vpop.permute.xlu0 %455
    %458 = vset.pattern.permute.xlu0 6
    %459 = vperm.xlu0 %458, %v37
    %v460 = vpop.permute.xlu0 %459
    %462 = vset.pattern.permute.xlu0 6
    %463 = vperm.xlu0 %462, %v38
    %v464 = vpop.permute.xlu0 %463
    %v466 = vadd.f32 %v446, %v452
    %v467 = vadd.f32 %v447, %v456
    %v468 = vadd.f32 %v448, %v460
    %v469 = vadd.f32 %v449, %v464
    %v470 = vmin.f32 %v466, 0.0
    %v471 = vmin.f32 %v467, 0.0
    %v472 = vmin.f32 %v468, 0.0
    %v473 = vmin.f32 %v469, 0.0
    %v474 = vmul.f32 %v470, 1.442695
    %v475 = vpow.pop %v474
    %v476 = vmul.f32 %v471, 1.442695
    %v477 = vpow.pop %v476
    %v478 = vmul.f32 %v472, 1.442695
    %v479 = vpow.pop %v478
    %v480 = vmul.f32 %v473, 1.442695
    %v481 = vpow.pop %v480
    %v482 = vsub.f32 %v475, 1.0
    %v483 = vsub.f32 %v477, 1.0
    %v484 = vsub.f32 %v479, 1.0
    %v485 = vsub.f32 %v481, 1.0
    %vm486 = vcmp.gt.f32.partialorder %v466, 0.0
    %vm487 = vcmp.gt.f32.partialorder %v467, 0.0
    %vm488 = vcmp.gt.f32.partialorder %v468, 0.0
    %vm489 = vcmp.gt.f32.partialorder %v469, 0.0
    %v490 = vmul.f32 %v482, 1.6732632
    %v491 = vmul.f32 %v483, 1.6732632
    %v492 = vmul.f32 %v484, 1.6732632
    %v493 = vmul.f32 %v485, 1.6732632
    %v494 = vsel %vm486, %v466, %v490
    %v495 = vsel %vm487, %v467, %v491
    %v496 = vsel %vm488, %v468, %v492
    %v497 = vsel %vm489, %v469, %v493
    %v498 = vmul.f32 %v494, 1.050701
    %v499 = vmul.f32 %v495, 1.050701
    %v500 = vmul.f32 %v496, 1.050701
    %v501 = vmul.f32 %v497, 1.050701
    %v502 = vadd.f32 %v321, %v498
    %v503 = vadd.f32 %v322, %v499
    %v504 = vadd.f32 %v323, %v500
    %v505 = vadd.f32 %v324, %v501
    %v506 = vld [vmem:[%s3] sm:$0xff]
    %v507 = vld [vmem:[%s3 + $0x8] sm:$0xff]
    %v508 = vld [vmem:[%s6] sm:$0xff]
    %v509 = vld [vmem:[%s6 + $0x8] sm:$0xff]
    %511 = vset.pattern.permute.xlu0 0
    %512 = vperm.xlu0 %511, %v508
    %v513 = vpop.permute.xlu0 %512
    %516 = vset.pattern.permute.xlu0 0
    %517 = vperm.xlu0 %516, %v509
    %v518 = vpop.permute.xlu0 %517
    %v521 = vsel %vm157, %v506, 0
    %v524 = vsel %vm157, %v507, 0
    %526 = vmatpush.msra.mxu0 0.0
    %527 = vmatpush.msra.mxu0 0.0
    %528 = vmatpush.msra.mxu0 0.0
    %529 = vmatpush.msra.mxu0 0.0
    %530 = vmatpush.msra.mxu0 0.0
    %531 = vmatpush.msra.mxu0 0.0
    %532 = vmatpush.msra.mxu0 0.0
    %533 = vmatpush.msra.mxu0 0.0
    %534 = vmatpush.msra.mxu0 0.0
    %535 = vmatpush.msra.mxu0 0.0
    %536 = vmatpush.msra.mxu0 0.0
    %537 = vmatpush.msra.mxu0 0.0
    %538 = vmatpush.msra.mxu0 %v505
    %539 = vmatpush.msra.mxu0 %v504
    %540 = vmatpush.msra.mxu0 %v503
    %541 = vmatpush.msra.mxu0 %v502
    %542 = vmatmul.f32.gmra.mxu0 %v521
    %v543 = vpop.f32.mrf.mxu0
    %v544 = vadd.f32 %v513, %v543
    %545 = vmatmul.f32.gmra.mxu0 %v524
    %v546 = vpop.f32.mrf.mxu0
    %v547 = vadd.f32 %v518, %v546
    %548 = vdwg.mxu0
    %v549 = vadd.f32 %v544, %v547
    %v550 = vrot.slane %v549, 4
    %v551 = vadd.f32 %v549, %v550
    %v552 = vrot.slane %v551, 2
    %v553 = vadd.f32 %v551, %v552
    %v554 = vrot.slane %v553, 1
    %v555 = vadd.f32 %v553, %v554
    %v556 = vrcp.pop 16.0
    %v557 = vmul.f32 16.0, %v556
    %v558 = vsub.f32 1.0, %v557
    %v559 = vmul.f32 %v556, %v558
    %v560 = vadd.f32 %v556, %v559
    %vm561 = vweird.f32 %v556
    %v562 = vsel %vm561, %v556, %v560
    %v563 = vmul.f32 %v555, %v562
    %v564 = vsub.f32 %v544, %v563
    %v565 = vsub.f32 %v547, %v563
    %v566 = vmul.f32 %v564, %v564
    %v567 = vmul.f32 %v565, %v565
    %v568 = vadd.f32 %v566, %v567
    %v569 = vrot.slane %v568, 4
    %v570 = vadd.f32 %v568, %v569
    %v571 = vrot.slane %v570, 2
    %v572 = vadd.f32 %v570, %v571
    %v573 = vrot.slane %v572, 1
    %v574 = vadd.f32 %v572, %v573
    %v575 = vmul.f32 %v574, %v562
    %v576 = vadd.f32 %v575, 1e-05
    %v577 = vrsqrt.pop %v576
    %v578 = vmul.f32 %v577, %v576
    %v579 = vmul.f32 %v578, %v577
    %v580 = vmul.f32 0.5, %v579
    %v581 = vsub.f32 1.5, %v580
    %v582 = vmul.f32 %v577, %v581
    %vm583 = vweird.f32 %v576
    %vm584 = vweird.f32 %v577
    %vm585 = vmor %vm583, %vm584
    %v586 = vsel %vm585, %v577, %v582
    %v587 = vmul.f32 %v564, %v586
    %v588 = vmul.f32 %v565, %v586
    %589 = vset.pattern.permute.xlu0 1
    %590 = vperm.xlu0 %589, %v508
    %v591 = vpop.permute.xlu0 %590
    %593 = vset.pattern.permute.xlu0 1
    %594 = vperm.xlu0 %593, %v509
    %v595 = vpop.permute.xlu0 %594
    %v597 = vmul.f32 %v587, %v591
    %v598 = vmul.f32 %v588, %v595
    %599 = vset.pattern.permute.xlu0 2
    %600 = vperm.xlu0 %599, %v508
    %v601 = vpop.permute.xlu0 %600
    %603 = vset.pattern.permute.xlu0 2
    %604 = vperm.xlu0 %603, %v509
    %v605 = vpop.permute.xlu0 %604
    %v607 = vadd.f32 %v597, %v601
    %v608 = vadd.f32 %v598, %v605
    %609 = vst [vmem:[#allocation2] sm:$0xff] %v607
    %610 = vst [vmem:[#allocation2 + $0x8] sm:$0xff] %v608
    %v611 = vld [vmem:[%s4] sm:$0xff]
    %v612 = vld [vmem:[%s7] sm:$0xff]
    %614 = vset.pattern.permute.xlu0 0
    %615 = vperm.xlu0 %614, %v612
    %v616 = vpop.permute.xlu0 %615
    %vm618 = vcmask 130048
    %v620 = vsel %vm618, %v611, 0
    %622 = vmatpush.msra.mxu0 0.0
    %623 = vmatpush.msra.mxu0 0.0
    %624 = vmatpush.msra.mxu0 0.0
    %625 = vmatpush.msra.mxu0 0.0
    %626 = vmatpush.msra.mxu0 0.0
    %627 = vmatpush.msra.mxu0 0.0
    %628 = vmatpush.msra.mxu0 0.0
    %629 = vmatpush.msra.mxu0 0.0
    %630 = vmatpush.msra.mxu0 0.0
    %631 = vmatpush.msra.mxu0 0.0
    %632 = vmatpush.msra.mxu0 0.0
    %633 = vmatpush.msra.mxu0 0.0
    %634 = vmatpush.msra.mxu0 0.0
    %635 = vmatpush.msra.mxu0 0.0
    %636 = vmatpush.msra.mxu0 %v608
    %637 = vmatpush.msra.mxu0 %v607
    %638 = vmatmul.f32.gmra.mxu0 %v620
    %v639 = vpop.f32.mrf.mxu0
    %v640 = vadd.f32 %v616, %v639
    %641 = vdwg.mxu0
    %642 = vst [vmem:[#allocation2 + $0x10] sm:$0xff] %v640
    %v643 = vrot.slane %v30, 3
    %v645 = vsub.f32 %v640, %v643
    %646 = vst [vmem:[#allocation2 + $0x10] sm:$0x60] %v645
    // Predicated region
    $region34: #{tpu_custom_call.1} parent=1 // pred_check
      _
    $region35: #{tpu_custom_call.1} parent=1 // pred_check_branch
      %648 = sbr.rel (0) target = $region37
    $region36: #{tpu_custom_call.1} parent=1 // pred_region
      %650 = vsyncadd [#allocation3], 0
      %s651 = sshll.u32 [#allocation2], 4
      %s652 = int_to_ptr.vmem [resolvable:$true] %s651
      %s653 = sshll.u32 %s8, 4
      %s654 = int_to_ptr.hbm [resolvable:$true] %s653
      %659 = dma.vmem_to_hbm [thread:$0]  %s652, 384, %s654, [#allocation3], 128, 128, 8
    $region37: #{tpu_custom_call.1} parent=1 // pred_fallthru
      _
    // Predicated region
    $region38: #{tpu_custom_call.1} parent=1 // pred_check
      _
    $region39: #{tpu_custom_call.1} parent=1 // pred_check_branch
      %661 = sbr.rel (0) target = $region41
    $region40: #{tpu_custom_call.1} parent=1 // pred_region
      %663 = dma.done [#allocation3], 384
    $region41: #{tpu_custom_call.1} parent=1 // pred_fallthru
      _
    %664 = vsyncpa [#allocation3], 1

</llo_original>
